<compile_context>
chip_gen: v7x
topology: tpu7x:2x2x1
jax: 0.10.0
libtpu: 0.0.40
codegen_flags: <defaults>
</compile_context>

<pallas_src>
import jax
import jax.numpy as jnp
from jax.experimental import pallas as pl
from jax.experimental.pallas import tpu as pltpu


def _round_up(n, m):
    return ((n + m - 1) // m) * m


def mlp_kernel_o1(x_ref, w1_ref, b1_ref, w2_row_ref, b2_ref, o_ref):
    """Second layer has output width 1: use VPU mul + lane reduce, not the MXU."""
    # hidden = relu(x @ W1 + b1); hidden dim is padded to 128 (pad cols are 0).
    h = jnp.dot(x_ref[...], w1_ref[...], preferred_element_type=jnp.float32)
    h = jnp.maximum(h + b1_ref[...], 0.0)          # bias + ReLU on the VPU (f32)
    # y = h . w2  via elementwise multiply + cross-lane (XLU) reduction.
    y = jnp.sum(h * w2_row_ref[...], axis=-1, keepdims=True) + b2_ref[...]
    o_ref[...] = y.astype(o_ref.dtype)


def mlp_kernel_general(x_ref, w1_ref, b1_ref, w2_ref, b2_ref, o_ref):
    """Fallback for output width > 1: two MXU matmuls."""
    h = jnp.dot(x_ref[...], w1_ref[...], preferred_element_type=jnp.float32)
    h = jnp.maximum(h + b1_ref[...], 0.0)
    y = jnp.dot(h, w2_ref[...], preferred_element_type=jnp.float32) + b2_ref[...]
    o_ref[...] = y.astype(o_ref.dtype)


def net_forward(x, w1, b1, w2, b2):
    """Pallas forward of `Net`: relu(x @ w1 + b1) @ w2 + b2.

    x:  [B, F] f32
    w1: [F, H] f32   b1: [1, H] f32
    w2: [H, O] f32   b2: [1, O] f32
    """
    B, F = x.shape
    H = w1.shape[1]
    O = w2.shape[1]

    # Zero-pad the hidden dim up to a multiple of 128 lanes.  Padded hidden
    # units contribute exactly 0 (zero w1 columns, zero b1, relu(0)=0, zero w2
    # rows), so semantics are unchanged.
    Hp = _round_up(H, 128)
    if Hp != H:
        pad = Hp - H
        w1 = jnp.pad(w1, ((0, 0), (0, pad)))
        b1 = jnp.pad(b1, ((0, 0), (0, pad)))
        w2 = jnp.pad(w2, ((0, pad), (0, 0)))

    if O == 1:
        kernel = mlp_kernel_o1
        w2_arg = w2.T          # (1, Hp) row: broadcast-multiply against h
    else:
        kernel = mlp_kernel_general
        w2_arg = w2

    # Whole working set is a few KB -> single grid point, full-array blocks in
    # VMEM (block_shape == full array dims is always legal).
    def full_spec(a):
        return pl.BlockSpec(a.shape, lambda: (0,) * a.ndim,
                            memory_space=pltpu.VMEM)

    cost = pl.CostEstimate(
        flops=2 * B * F * Hp + 2 * B * Hp * O,
        transcendentals=0,
        bytes_accessed=4 * (x.size + w1.size + b1.size
                            + w2_arg.size + b2.size + B * O),
    )

    return pl.pallas_call(
        kernel,
        out_shape=jax.ShapeDtypeStruct((B, O), jnp.float32),
        grid=(),
        in_specs=[full_spec(x), full_spec(w1), full_spec(b1),
                  full_spec(w2_arg), full_spec(b2)],
        out_specs=pl.BlockSpec((B, O), lambda: (0, 0),
                               memory_space=pltpu.VMEM),
        cost_estimate=cost,
    )(x, w1, b1, w2_arg, b2)


def reference_forward(x, w1, b1, w2, b2):
    h = jnp.maximum(x @ w1 + b1, 0.0)
    return h @ w2 + b2


if __name__ == "__main__":
    # Boston-housing style: 13 input features, hidden=100, output=1.
    batch, feature, hidden, output = 8, 13, 100, 1

    key = jax.random.PRNGKey(0)
    kx, k1, k2, k3, k4 = jax.random.split(key, 5)

    x = jax.random.normal(kx, (batch, feature), dtype=jnp.float32)

    # Deterministic parameter init (uniform, like torch Linear's default range).
    bound1 = 1.0 / (feature ** 0.5)
    w1 = jax.random.uniform(k1, (feature, hidden), jnp.float32, -bound1, bound1)
    b1 = jax.random.uniform(k2, (1, hidden), jnp.float32, -bound1, bound1)
    bound2 = 1.0 / (hidden ** 0.5)
    w2 = jax.random.uniform(k3, (hidden, output), jnp.float32, -bound2, bound2)
    b2 = jax.random.uniform(k4, (1, output), jnp.float32, -bound2, bound2)

    out = net_forward(x, w1, b1, w2, b2)
    jax.block_until_ready(out)

    ref = reference_forward(x, w1, b1, w2, b2)
    assert out.shape == (batch, output)
    assert jnp.allclose(out, ref, atol=1e-5, rtol=1e-5)

    print("KERNEL_OK")
</pallas_src>

<mosaic_0001>
module attributes {stable_mosaic.version = 11 : i64} {
  func.func @mlp_kernel_o1(%arg0: memref<8x13xf32, #tpu.memory_space<vmem>>, %arg1: memref<13x128xf32, #tpu.memory_space<vmem>>, %arg2: memref<1x128xf32, #tpu.memory_space<vmem>>, %arg3: memref<1x128xf32, #tpu.memory_space<vmem>>, %arg4: memref<1x1xf32, #tpu.memory_space<vmem>>, %arg5: memref<8x1xf32, #tpu.memory_space<vmem>>) attributes {dimension_semantics = [], scalar_prefetch = 0 : i64, scratch_operands = 0 : i64, tpu.core_type = #tpu.core_type<tc>} {
    %c0 = arith.constant 0 : index
    %c0_0 = arith.constant 0 : index
    %0 = vector.load %arg0[%c0, %c0_0] : memref<8x13xf32, #tpu.memory_space<vmem>>, vector<8x13xf32>
    %c0_1 = arith.constant 0 : index
    %c0_2 = arith.constant 0 : index
    %1 = vector.load %arg1[%c0_1, %c0_2] : memref<13x128xf32, #tpu.memory_space<vmem>>, vector<13x128xf32>
    %cst = arith.constant dense<0.000000e+00> : vector<8x128xf32>
    %2 = tpu.matmul %0, %1, %cst {dimension_numbers = #tpu.dot_dimension_numbers<[1], [0], [0], [1], [0, 0, 1, 1], [], []>} : vector<8x13xf32>, vector<13x128xf32>, vector<8x128xf32> -> vector<8x128xf32>
    %c0_3 = arith.constant 0 : index
    %c0_4 = arith.constant 0 : index
    %3 = vector.load %arg2[%c0_3, %c0_4] : memref<1x128xf32, #tpu.memory_space<vmem>>, vector<1x128xf32>
    %4 = vector.broadcast %3 : vector<1x128xf32> to vector<8x128xf32>
    %5 = arith.addf %2, %4 : vector<8x128xf32>
    %cst_5 = arith.constant 0.000000e+00 : f32
    %6 = vector.broadcast %cst_5 : f32 to vector<8x128xf32>
    %7 = arith.maximumf %5, %6 : vector<8x128xf32>
    %c0_6 = arith.constant 0 : index
    %c0_7 = arith.constant 0 : index
    %8 = vector.load %arg3[%c0_6, %c0_7] : memref<1x128xf32, #tpu.memory_space<vmem>>, vector<1x128xf32>
    %9 = vector.broadcast %8 : vector<1x128xf32> to vector<8x128xf32>
    %10 = arith.mulf %7, %9 : vector<8x128xf32>
    %cst_8 = arith.constant dense<0.000000e+00> : vector<8xf32>
    %11 = vector.multi_reduction <add>, %10, %cst_8 [1] : vector<8x128xf32> to vector<8xf32>
    %12 = vector.shape_cast %11 : vector<8xf32> to vector<8x1xf32>
    %c0_9 = arith.constant 0 : index
    %c0_10 = arith.constant 0 : index
    %13 = vector.load %arg4[%c0_9, %c0_10] : memref<1x1xf32, #tpu.memory_space<vmem>>, vector<1x1xf32>
    %14 = vector.broadcast %13 : vector<1x1xf32> to vector<8x1xf32>
    %15 = arith.addf %12, %14 : vector<8x1xf32>
    %c0_11 = arith.constant 0 : index
    %c0_12 = arith.constant 0 : index
    %16 = vector.load %arg5[%c0_11, %c0_12] : memref<8x1xf32, #tpu.memory_space<vmem>>, vector<8x1xf32>
    tpu.vector_store %arg5[%c0_11, %c0_12], %15 {strides = array<i32>} : memref<8x1xf32, #tpu.memory_space<vmem>>, vector<8x1xf32>,
    return
  }
}

</mosaic_0001>

<llo_original>
// kernel: tpu_custom_call.1
$region0: #{tpu_custom_call.1}
  #allocation0 [shape = 'u32[]', space=smem, size = 0x4, offset = 0x4, fixed_abs, tag = 'smem constant byte address 0x4 - core index']
  #allocation1 [shape = 'u32[144,128]{1,0:T(1,128)}', space=vmem, size = 0x12000, scoped, tag = 'internal scratch']
  #allocation2 [shape = 'f32[1,1]{1,0:T(1,128)S(1)}', space=vmem, size = 0x200, scoped, tag = 'scoped memory for tpu_custom_call.1']
  %s0 = inlined_call_operand.hbm [shape: f32[8,13], index: 0, kind: input, shape index: {}]
  %s1 = inlined_call_operand.hbm [shape: f32[13,128], index: 1, kind: input, shape index: {}]
  %s2 = inlined_call_operand.vmem [shape: f32[1,128], index: 2, kind: input, shape index: {}]
  %s3 = inlined_call_operand.vmem [shape: f32[1,128], index: 3, kind: input, shape index: {}]
  %s4 = inlined_call_operand.<no memory space> [shape: f32[1,1], index: 4, kind: input, shape index: {}]
  %s5 = inlined_call_operand.vmem [shape: f32[8,1], index: 5, kind: output, shape index: {}]
  %s6 = sld [smem:[#allocation0]]
  $region38: #{tpu_custom_call.1} parent=0
    _
  %s8 = ssub.s32 1, %s6
  %s9 = scalar_select 0, %s8, %s6
  %v10 = vstv %s4
  %11 = vst [vmem:[#allocation2] sm:$0x1] %v10
  $region1: #{tpu_custom_call.1} parent=0
    #allocation3 [shape = 'u8[4096]{0}', space=vmem, size = 0x1000, scoped, tag = 'input window, operand 0, single buffered']
    #allocation4 [shape = 's32[1]{0}', space=sflag, size = 0x4, scoped, tag = 'scoped memory for tpu_custom_call.1']
    #allocation5 [shape = 'u8[8192]{0}', space=vmem, size = 0x2000, scoped, tag = 'input window, operand 1, single buffered']
    #allocation6 [shape = 's32[1]{0}', space=sflag, size = 0x4, scoped, tag = 'scoped memory for tpu_custom_call.1']
    %12 = vsyncpa [#allocation4], 0
    %13 = vsyncpa [#allocation6], 0
    // Predicated region
    $region2: #{tpu_custom_call.1} parent=1 // pred_check
      _
    $region3: #{tpu_custom_call.1} parent=1 // pred_check_branch
      %15 = sbr.rel (0) target = $region5
    $region4: #{tpu_custom_call.1} parent=1 // pred_region
      %s17 = ssub.s32 128, 128
      %18 = vsyncadd [#allocation4], %s17
      %s20 = sshll.u32 [#allocation3], 4
      %s21 = int_to_ptr.vmem [resolvable:$true] %s20
      %23 = dma.hbm_to_vmem [thread:$0]  %s0, 128, %s21, [#allocation4]
    $region5: #{tpu_custom_call.1} parent=1 // pred_fallthru
      _
    // Predicated region
    $region6: #{tpu_custom_call.1} parent=1 // pred_check
      _
    $region7: #{tpu_custom_call.1} parent=1 // pred_check_branch
      %25 = sbr.rel (0) target = $region9
    $region8: #{tpu_custom_call.1} parent=1 // pred_region
      %s27 = ssub.s32 256, 256
      %28 = vsyncadd [#allocation6], %s27
      %s29 = sshll.u32 [#allocation5], 4
      %s30 = int_to_ptr.vmem [resolvable:$true] %s29
      %35 = dma.hbm_to_vmem [thread:$0]  %s1, 256, %s30, [#allocation6], 128, 128, 8
    $region9: #{tpu_custom_call.1} parent=1 // pred_fallthru
      _
    // Predicated region
    $region10: #{tpu_custom_call.1} parent=1 // pred_check
      _
    $region11: #{tpu_custom_call.1} parent=1 // pred_check_branch
      %37 = sbr.rel (0) target = $region13
    $region12: #{tpu_custom_call.1} parent=1 // pred_region
      _
    $region13: #{tpu_custom_call.1} parent=1 // pred_fallthru
      _
    // Predicated region
    $region14: #{tpu_custom_call.1} parent=1 // pred_check
      _
    $region15: #{tpu_custom_call.1} parent=1 // pred_check_branch
      %39 = sbr.rel (0) target = $region17
    $region16: #{tpu_custom_call.1} parent=1 // pred_region
      _
    $region17: #{tpu_custom_call.1} parent=1 // pred_fallthru
      _
    // Predicated region
    $region18: #{tpu_custom_call.1} parent=1 // pred_check
      _
    $region19: #{tpu_custom_call.1} parent=1 // pred_check_branch
      %41 = sbr.rel (0) target = $region21
    $region20: #{tpu_custom_call.1} parent=1 // pred_region
      _
    $region21: #{tpu_custom_call.1} parent=1 // pred_fallthru
      _
    // Predicated region
    $region22: #{tpu_custom_call.1} parent=1 // pred_check
      _
    $region23: #{tpu_custom_call.1} parent=1 // pred_check_branch
      %43 = sbr.rel (0) target = $region25
    $region24: #{tpu_custom_call.1} parent=1 // pred_region
      %44 = dma.done [#allocation4], 128
    $region25: #{tpu_custom_call.1} parent=1 // pred_fallthru
      _
    // Predicated region
    $region26: #{tpu_custom_call.1} parent=1 // pred_check
      _
    $region27: #{tpu_custom_call.1} parent=1 // pred_check_branch
      %46 = sbr.rel (0) target = $region29
    $region28: #{tpu_custom_call.1} parent=1 // pred_region
      %47 = dma.done [#allocation6], 256
    $region29: #{tpu_custom_call.1} parent=1 // pred_fallthru
      _
    %v48 = vld [vmem:[#allocation3] sm:$0xff]
    %v49 = vld [vmem:[#allocation5] sm:$0xff]
    %v50 = vld [vmem:[#allocation5 + $0x8] sm:$0x1f]
    %v51 = vld [vmem:[%s2] sm:$0x1]
    %v53 = vlaneseq
    %v54 = vshrl.u32 %v53, 7
    %v55 = vsub.s32 0, %v54
    %v56 = vrot.slane %v51, %v55
    %vm58 = vcmask 105472
    %v60 = vsel %vm58, %v48, 0
    %vm62 = vcmask 1044480
    %v64 = vsel %vm62, %v50, 0
    %66 = vmatprep.subr.mxu0 0.0
    %67 = vmatpush1.msra.mxu0 %v49
    %68 = vmatprep.subr.mxu0 0.0
    %69 = vmatpush1.msra.mxu0 %v64
    %70 = vmatprep.subr.mxu0 0.0
    %71 = vmatpush1.msra.mxu0 0.0
    %72 = vmatprep.subr.mxu0 0.0
    %73 = vmatpush1.msra.mxu0 0.0
    %74 = vmatprep.subr.mxu0 0.0
    %75 = vmatpush1.msra.mxu0 0.0
    %76 = vmatprep.subr.mxu0 0.0
    %77 = vmatpush1.msra.mxu0 0.0
    %78 = vmatprep.subr.mxu0 0.0
    %79 = vmatpush1.msra.mxu0 0.0
    %80 = vmatprep.subr.mxu0 0.0
    %81 = vmatpush1.msra.mxu0 0.0
    %82 = vmatprep.subr.mxu0 0.0
    %83 = vmatpush1.msra.mxu0 0.0
    %84 = vmatprep.subr.mxu0 0.0
    %85 = vmatpush1.msra.mxu0 0.0
    %86 = vmatprep.subr.mxu0 0.0
    %87 = vmatpush1.msra.mxu0 0.0
    %88 = vmatprep.subr.mxu0 0.0
    %89 = vmatpush1.msra.mxu0 0.0
    %90 = vmatprep.subr.mxu0 0.0
    %91 = vmatpush1.msra.mxu0 0.0
    %92 = vmatprep.subr.mxu0 0.0
    %93 = vmatpush1.msra.mxu0 0.0
    %94 = vmatprep.subr.mxu0 0.0
    %95 = vmatpush1.msra.mxu0 0.0
    %96 = vmatprep.subr.mxu0 0.0
    %97 = vmatpush1.msra.mxu0 0.0
    %98 = vmatprep.subr.mxu0 0.0
    %99 = vmatpush1.msra.mxu0 0.0
    %100 = vmatprep.subr.mxu0 0.0
    %101 = vmatpush1.msra.mxu0 0.0
    %102 = vmatprep.subr.mxu0 0.0
    %103 = vmatpush1.msra.mxu0 0.0
    %104 = vmatprep.subr.mxu0 0.0
    %105 = vmatpush1.msra.mxu0 0.0
    %106 = vmatprep.subr.mxu0 0.0
    %107 = vmatpush1.msra.mxu0 0.0
    %108 = vmatprep.subr.mxu0 0.0
    %109 = vmatpush1.msra.mxu0 0.0
    %110 = vmatprep.subr.mxu0 0.0
    %111 = vmatpush1.msra.mxu0 0.0
    %112 = vmatprep.subr.mxu0 0.0
    %113 = vmatpush1.msra.mxu0 0.0
    %114 = vmatprep.subr.mxu0 0.0
    %115 = vmatpush1.msra.mxu0 0.0
    %116 = vmatprep.subr.mxu0 0.0
    %117 = vmatpush1.msra.mxu0 0.0
    %118 = vmatprep.subr.mxu0 0.0
    %119 = vmatpush1.msra.mxu0 0.0
    %120 = vmatprep.subr.mxu0 0.0
    %121 = vmatpush1.msra.mxu0 0.0
    %122 = vmatprep.subr.mxu0 0.0
    %123 = vmatpush1.msra.mxu0 0.0
    %124 = vmatprep.subr.mxu0 0.0
    %125 = vmatpush1.msra.mxu0 0.0
    %126 = vmatprep.subr.mxu0 0.0
    %127 = vmatpush1.msra.mxu0 0.0
    %128 = vmatprep.subr.mxu0 0.0
    %129 = vmatpush1.msra.mxu0 0.0
    %130 = vmatprep.mubr.f32.mxu0 0.0
    %131 = vmatmul.mubr.f32.gmra.mrb[0].mxu0 %v60
    %v132 = vpop.f32.mrb[0].mxu0
    %v133 = vadd.f32 %v56, %v132
    %v134 = vpop.f32.mrb[0].mxu0
    %135 = vdwg.mxu0
    %v136 = vmax.f32 %v133, 0.0
    %v137 = vld [vmem:[%s3] sm:$0x1]
    %v139 = vlaneseq
    %v140 = vshrl.u32 %v139, 7
    %v141 = vsub.s32 0, %v140
    %v142 = vrot.slane %v137, %v141
    %v144 = vmul.f32 %v136, %v142
    %145 = vadd.xlane.f32.xlu0 %v144
    %v146 = vpop.xlane.xlu0 %145
    %v147 = vld [vmem:[#allocation2] sm:$0x1]
    %v149 = vlaneseq
    %v150 = vshrl.u32 %v149, 7
    %v151 = vsub.s32 0, %v150
    %v152 = vrot.slane %v147, %v151
    %v154 = vadd.f32 %v146, %v152
    %vm155 = vcmask 7168
    %156 = vst.msk [vmem:[%s5] sm:$0xff] %vm155, %v154
    // Predicated region
    $region30: #{tpu_custom_call.1} parent=1 // pred_check
      _
    $region31: #{tpu_custom_call.1} parent=1 // pred_check_branch
      %158 = sbr.rel (0) target = $region33
    $region32: #{tpu_custom_call.1} parent=1 // pred_region
      _
    $region33: #{tpu_custom_call.1} parent=1 // pred_fallthru
      _
    // Predicated region
    $region34: #{tpu_custom_call.1} parent=1 // pred_check
      _
    $region35: #{tpu_custom_call.1} parent=1 // pred_check_branch
      %160 = sbr.rel (0) target = $region37
    $region36: #{tpu_custom_call.1} parent=1 // pred_region
      _
    $region37: #{tpu_custom_call.1} parent=1 // pred_fallthru
      _
    %161 = vsyncpa [#allocation4], 1
    %162 = vsyncpa [#allocation6], 1

</llo_original>
